<compile_context>
chip_gen: v7x
topology: tpu7x:2x2x1
jax: 0.10.0
libtpu: 0.0.40
codegen_flags: <defaults>
</compile_context>

<pallas_src>
import jax
import jax.numpy as jnp
from jax.experimental import pallas as pl
from jax.experimental.pallas import tpu as pltpu


def _round_up(x, m):
    return ((x + m - 1) // m) * m


def _linear_kernel(x_ref, w_ref, o_ref):
    """o = x @ w, with w already in [K, C_out] layout (plain MXU contraction)."""
    o_ref[...] = jnp.dot(
        x_ref[...], w_ref[...], preferred_element_type=jnp.float32
    ).astype(o_ref.dtype)


def _vmem_capacity_bytes():
    try:
        return int(pltpu.get_tpu_info().vmem_capacity_bytes)
    except Exception:
        return 64 << 20  # conservative fallback: v7x per-TensorCore VMEM


def last_unary_block(x, weight, *, tm=2048):
    """Forward pass of LastUnaryBlock.

    Args:
      x:      [N, input_dim] point features.
      weight: [output_dim, input_dim] (PyTorch nn.Linear convention, no bias).
      tm:     maximum row tile over the point dimension (auto-clamped).

    Returns:
      [N, output_dim]
    """
    N, K = x.shape
    C_out, K_w = weight.shape
    assert K == K_w, "input_dim mismatch"

    out_dtype = x.dtype
    x_size = jnp.dtype(x.dtype).itemsize
    w_size = jnp.dtype(weight.dtype).itemsize
    o_size = jnp.dtype(out_dtype).itemsize

    # One-time transpose of the (small) parameter -> [K, C_out] so the kernel
    # contracts the RHS on its sublane dim (no per-step weight transpose).
    w_t = weight.T

    # Sublane granularity of the row tile (f32: 8, bf16: 16, int8/fp8: 32).
    row_g = max(8, 32 // x_size)

    def _vmem_need(t):
        # double-buffered x tile + double-buffered out tile + weight
        # (resident, but conservatively counted as double-buffered).
        return 2 * t * K * x_size + 2 * t * C_out * o_size + 2 * K * C_out * w_size

    vmem_cap = _vmem_capacity_bytes()
    budget = int(vmem_cap * 0.70)  # ~89 MiB on 128 MiB parts, ~45 MiB on v7x

    # At least 2 grid steps when N allows, so the "parallel" row axis can
    # shard across both TensorCores on v7x (no-op on single-TC chips).
    if N > row_g:
        tm = min(tm, _round_up(pl.cdiv(N, 2), row_g))
    tm = max(row_g, min(tm, _round_up(N, row_g)))
    while tm > row_g and _vmem_need(tm) > budget:
        tm = _round_up(max(row_g, tm // 2), row_g)

    # Ragged final tile: no padding of x, no post-kernel row slice.
    grid = (pl.cdiv(N, tm),)

    vmem_limit = int(
        min(max(_vmem_need(tm) + (4 << 20), 32 << 20), vmem_cap - (4 << 20))
    )

    cost = pl.CostEstimate(
        flops=2 * N * K * C_out,
        transcendentals=0,
        bytes_accessed=N * K * x_size + K * C_out * w_size + N * C_out * o_size,
    )

    return pl.pallas_call(
        _linear_kernel,
        out_shape=jax.ShapeDtypeStruct((N, C_out), out_dtype),
        grid_spec=pltpu.PrefetchScalarGridSpec(
            num_scalar_prefetch=0,
            grid=grid,
            in_specs=[
                # Streamed rows of x: one tile per grid step.
                pl.BlockSpec((tm, K), lambda i: (i, 0)),
                # Resident weight: constant block index -> DMA'd once.
                pl.BlockSpec((K, C_out), lambda i: (0, 0)),
            ],
            # Last block dim equals the full array dim, so C_out < 128 is legal;
            # output written directly at its true width (no channel padding).
            out_specs=pl.BlockSpec((tm, C_out), lambda i: (i, 0)),
        ),
        compiler_params=pltpu.CompilerParams(
            dimension_semantics=("parallel",),
            vmem_limit_bytes=vmem_limit,
        ),
        cost_estimate=cost,
    )(x, w_t)


if __name__ == "__main__":
    # Deterministic synthetic parameters / inputs (KPConv-like head shapes:
    # arbitrary point count, small class-count output).
    key = jax.random.PRNGKey(0)
    kx, kw = jax.random.split(key)

    N = 250           # number of points (not a tile multiple on purpose)
    input_dim = 128
    output_dim = 19   # e.g. semantic class count (exercises narrow-lane output)

    x = jax.random.normal(kx, (N, input_dim), dtype=jnp.float32)
    # nn.Linear weight: [output_dim, input_dim]
    weight = jax.random.normal(kw, (output_dim, input_dim), dtype=jnp.float32) * 0.02

    y = jax.block_until_ready(last_unary_block(x, weight))

    # Correctness check against plain-JAX reference (y = x @ W.T).
    y_ref = x @ weight.T
    assert y.shape == (N, output_dim)
    assert jnp.allclose(y, y_ref, atol=2e-3, rtol=2e-3), "mismatch vs reference"

    print("KERNEL_OK")
</pallas_src>

<mosaic_0001>
module attributes {stable_mosaic.version = 11 : i64} {
  func.func @_linear_kernel(%arg0: i32, %arg1: memref<128x128xf32, #tpu.memory_space<vmem>>, %arg2: memref<128x19xf32, #tpu.memory_space<vmem>>, %arg3: memref<128x19xf32, #tpu.memory_space<vmem>>) attributes {dimension_semantics = [#tpu.dimension_semantics<parallel>], iteration_bounds = array<i64: 2>, scalar_prefetch = 0 : i64, scratch_operands = 0 : i64, tpu.core_type = #tpu.core_type<tc>, window_params = [{transform_indices = @transform_0, window_bounds = array<i64: 128, 128>}, {pipeline_mode = #tpu.pipeline_mode<synchronous>, transform_indices = @transform_1, window_bounds = array<i64: 128, 19>}, {transform_indices = @transform_2, window_bounds = array<i64: 128, 19>}]} {
    %c0 = arith.constant 0 : index
    %c0_0 = arith.constant 0 : index
    %0 = vector.load %arg1[%c0, %c0_0] : memref<128x128xf32, #tpu.memory_space<vmem>>, vector<128x128xf32>
    %c0_1 = arith.constant 0 : index
    %c0_2 = arith.constant 0 : index
    %1 = vector.load %arg2[%c0_1, %c0_2] : memref<128x19xf32, #tpu.memory_space<vmem>>, vector<128x19xf32>
    %cst = arith.constant dense<0.000000e+00> : vector<128x19xf32>
    %2 = tpu.matmul %0, %1, %cst {dimension_numbers = #tpu.dot_dimension_numbers<[1], [0], [0], [1], [0, 0, 1, 1], [], []>} : vector<128x128xf32>, vector<128x19xf32>, vector<128x19xf32> -> vector<128x19xf32>
    %c0_3 = arith.constant 0 : index
    %c0_4 = arith.constant 0 : index
    %3 = vector.load %arg3[%c0_3, %c0_4] : memref<128x19xf32, #tpu.memory_space<vmem>>, vector<128x19xf32>
    tpu.vector_store %arg3[%c0_3, %c0_4], %2 {strides = array<i32>} : memref<128x19xf32, #tpu.memory_space<vmem>>, vector<128x19xf32>,
    return
  }
  func.func @transform_0(%arg0: i32) -> (i32, i32) {
    %c0_i32 = arith.constant 0 : i32
    %c0_i32_0 = arith.constant 0 : i32
    return %arg0, %c0_i32 : i32, i32
  }
  func.func @transform_1(%arg0: i32) -> (i32, i32) {
    %c0_i32 = arith.constant 0 : i32
    %c0_i32_0 = arith.constant 0 : i32
    %c0_i32_1 = arith.constant 0 : i32
    return %c0_i32, %c0_i32_0 : i32, i32
  }
  func.func @transform_2(%arg0: i32) -> (i32, i32) {
    %c0_i32 = arith.constant 0 : i32
    %c0_i32_0 = arith.constant 0 : i32
    return %arg0, %c0_i32 : i32, i32
  }
}

</mosaic_0001>

<llo_original>
// kernel: tpu_custom_call.1
$region0: #{tpu_custom_call.1}
  #allocation0 [shape = 'u32[]', space=smem, size = 0x4, offset = 0x4, fixed_abs, tag = 'smem constant byte address 0x4 - core index']
  #allocation1 [shape = 'u32[144,128]{1,0:T(1,128)}', space=vmem, size = 0x12000, scoped, tag = 'internal scratch']
  %s0 = inlined_call_operand.hbm [shape: f32[250,128], index: 0, kind: input, shape index: {}]
  %s1 = inlined_call_operand.vmem [shape: f32[128,19], index: 1, kind: input, shape index: {}]
  %s2 = inlined_call_operand.vmem [shape: f32[250,19], index: 2, kind: output, shape index: {}]
  %s3 = sld [smem:[#allocation0]]
  $region45: #{tpu_custom_call.1} parent=0
    _
  %s5 = ssub.s32 1, %s3
  %s6 = scalar_select 0, %s5, %s3
  $region1: #{tpu_custom_call.1} parent=0
    #allocation2 [shape = 'u8[131072]{0}', space=vmem, size = 0x20000, scoped, tag = 'input window, operand 0']
    #allocation3 [shape = 's32[2]{0}', space=sflag, size = 0x8, scoped, tag = 'scoped memory for tpu_custom_call.1']
    %7 = vsyncpa [#allocation3], 0
    %s8 = scalar_lea.sflag [#allocation3], 1
    %9 = vsyncpa %s8, 0
    loop: start=0, step=1, limit=4
    $region2: #{tpu_custom_call.1} parent=1 // loop_pre_header
      _
    $region3: #{tpu_custom_call.1} parent=1 // loop_header
      %s11 = sphi 0, %s15
      %p12 = scmp.ge.s32.totalorder %s11, 4
      %s21 = sphi 0, %s23
      %s24 = sphi 0, %s21
      %s25 = sphi 0, %s24
      %s41 = sphi 0, %s25
      %s45 = sphi 0, %s45
      %s47 = sphi 0, %s45
      %s48 = sphi 0, %s47
      %s62 = sphi 0, %s48
      %s68 = sphi 0, %s70
      %s71 = sphi 0, %s68
      %s72 = sphi 0, %s71
      %s88 = sphi 0, %s72
    $region4: #{tpu_custom_call.1} parent=1 // loop_header_branch
      %14 = sbr.rel (%p12) target = $region8
    $region5: #{tpu_custom_call.1} parent=1 // loop_body
      %s16 = ssub.s32 %s11, 1
      %s17 = ssub.s32 %s11, 2
      %s18 = sadd.s32 %s11, 1
      %s19 = ssub.s32 %s11, %s18
      %p20 = scmp.eq.s32.totalorder %s19, 0
      %s22 = sadd.s32 %s21, 1
      %s23 = scalar_select %p20, %s21, %s22
      %p26 = pneg %p20
      %p27 = scmp.eq.s32.totalorder %s11, 1
      %p28 = por %p26, %p27
      %p29 = scmp.ne.s32.totalorder %s21, %s24
      %p30 = scmp.eq.s32.totalorder %s11, 0
      %p31 = por %p29, %p30
      %p32 = scmp.ne.s32.totalorder %s21, %s24
      %p33 = scmp.eq.s32.totalorder %s16, 1
      %p34 = por %p32, %p33
      %p35 = scmp.ne.s32.totalorder %s24, %s25
      %p36 = scmp.eq.s32.totalorder %s16, 0
      %p37 = por %p35, %p36
      %p38 = scmp.ne.s32.totalorder %s24, %s25
      %p39 = scmp.eq.s32.totalorder %s17, 1
      %p40 = por %p38, %p39
      %p42 = scmp.ne.s32.totalorder %s25, %s41
      %p43 = scmp.eq.s32.totalorder %s17, 0
      %p44 = por %p42, %p43
      %s46 = sadd.s32 %s45, 1
      %p49 = scmp.eq.s32.totalorder %s11, 1
      %p50 = scmp.ne.s32.totalorder %s45, %s47
      %p51 = scmp.eq.s32.totalorder %s11, 0
      %p52 = por %p50, %p51
      %p53 = scmp.ne.s32.totalorder %s45, %s47
      %p54 = scmp.eq.s32.totalorder %s16, 1
      %p55 = por %p53, %p54
      %p56 = scmp.ne.s32.totalorder %s47, %s48
      %p57 = scmp.eq.s32.totalorder %s16, 0
      %p58 = por %p56, %p57
      %p59 = scmp.ne.s32.totalorder %s47, %s48
      %p60 = scmp.eq.s32.totalorder %s17, 1
      %p61 = por %p59, %p60
      %p63 = scmp.ne.s32.totalorder %s48, %s62
      %p64 = scmp.eq.s32.totalorder %s17, 0
      %p65 = por %p63, %p64
      %s66 = ssub.s32 %s11, %s18
      %p67 = scmp.eq.s32.totalorder %s66, 0
      %s69 = sadd.s32 %s68, 1
      %s70 = scalar_select %p67, %s68, %s69
      %p73 = pneg %p67
      %p74 = scmp.eq.s32.totalorder %s11, 1
      %p75 = por %p73, %p74
      %p76 = scmp.ne.s32.totalorder %s68, %s71
      %p77 = scmp.eq.s32.totalorder %s11, 0
      %p78 = por %p76, %p77
      %p79 = scmp.ne.s32.totalorder %s68, %s71
      %p80 = scmp.eq.s32.totalorder %s16, 1
      %p81 = por %p79, %p80
      %p82 = scmp.ne.s32.totalorder %s71, %s72
      %p83 = scmp.eq.s32.totalorder %s16, 0
      %p84 = por %p82, %p83
      %p85 = scmp.ne.s32.totalorder %s71, %s72
      %p86 = scmp.eq.s32.totalorder %s17, 1
      %p87 = por %p85, %p86
      %p89 = scmp.ne.s32.totalorder %s72, %s88
      %p90 = scmp.eq.s32.totalorder %s17, 0
      %p91 = por %p89, %p90
      %p92 = scmp.le.s32.totalorder 1, %s11
      %p93 = scmp.lt.s32.totalorder %s11, 3
      %p94 = pnand %p92, %p93
      %p95 = pneg %p94
      // Predicated region
      $region9: #{tpu_custom_call.1} parent=5 // pred_check
        _
      $region10: #{tpu_custom_call.1} parent=5 // pred_check_branch
        %97 = sbr.rel (%p94) target = $region12
      $region11: #{tpu_custom_call.1} parent=5 // pred_region
        %s98 = ssub.s32 %s11, 1
        // Predicated region
        $region13: #{tpu_custom_call.1} parent=11 // pred_check
          %p99 = pneg %p58
        $region14: #{tpu_custom_call.1} parent=11 // pred_check_branch
          %101 = sbr.rel (%p99) target = $region16
        $region15: #{tpu_custom_call.1} parent=11 // pred_region
          _
        $region16: #{tpu_custom_call.1} parent=11 // pred_fallthru
          _
      $region12: #{tpu_custom_call.1} parent=5 // pred_fallthru
        _
      %p102 = scmp.lt.s32.totalorder %s11, 2
      // Predicated region
      $region17: #{tpu_custom_call.1} parent=5 // pred_check
        %p103 = pneg %p102
      $region18: #{tpu_custom_call.1} parent=5 // pred_check_branch
        %105 = sbr.rel (%p103) target = $region20
      $region19: #{tpu_custom_call.1} parent=5 // pred_region
        // Predicated region
        $region21: #{tpu_custom_call.1} parent=19 // pred_check
          %p106 = pneg %p31
        $region22: #{tpu_custom_call.1} parent=19 // pred_check_branch
          %108 = sbr.rel (%p106) target = $region24
        $region23: #{tpu_custom_call.1} parent=19 // pred_region
          %s109 = sand.u32 %s21, 1
          %s110 = scalar_lea.sflag [#allocation3], %s109
          %s111 = sand.u32 %s21, 1
          %s112 = smul.addr %s111, 128
          %s113 = scalar_lea.vmem [#allocation2], %s112
          %s114 = smul.u32 16, %s11
          %s116 = ssub.s32 2048, 2048
          %117 = vsyncadd %s110, %s116
          %s118 = smul.addr %s114, 128
          %s119 = scalar_lea.hbm %s0, %s118
          %s120 = sshll.u32 %s113, 4
          %s121 = int_to_ptr.vmem [resolvable:$true] %s120
          %126 = dma.hbm_to_vmem [thread:$0]  %s119, 2048, %s121, %s110, 128, 128, 8
        $region24: #{tpu_custom_call.1} parent=19 // pred_fallthru
          _
      $region20: #{tpu_custom_call.1} parent=5 // pred_fallthru
        _
      %p127 = scmp.le.s32.totalorder 1, %s11
      %p128 = scmp.lt.s32.totalorder %s11, 3
      %p129 = pnand %p127, %p128
      %p130 = pneg %p129
      // Predicated region
      $region25: #{tpu_custom_call.1} parent=5 // pred_check
        _
      $region26: #{tpu_custom_call.1} parent=5 // pred_check_branch
        %132 = sbr.rel (%p129) target = $region28
      $region27: #{tpu_custom_call.1} parent=5 // pred_region
        %s133 = ssub.s32 %s11, 1
        %s134 = sand.u32 %s24, 1
        %s135 = scalar_lea.sflag [#allocation3], %s134
        %s136 = sand.u32 %s24, 1
        %s137 = smul.addr %s136, 128
        %s138 = scalar_lea.vmem [#allocation2], %s137
        // Predicated region
        $region29: #{tpu_custom_call.1} parent=27 // pred_check
          %p139 = pneg %p37
        $region30: #{tpu_custom_call.1} parent=27 // pred_check_branch
          %141 = sbr.rel (%p139) target = $region32
        $region31: #{tpu_custom_call.1} parent=27 // pred_region
          %142 = dma.done %s135, 2048
        $region32: #{tpu_custom_call.1} parent=27 // pred_fallthru
          _
        %s143 = sand.u32 %s24, 1
        %s144 = scalar_lea.sflag [#allocation3], %s143
        %s145 = sand.u32 %s24, 1
        %s146 = smul.addr %s145, 128
        %s147 = scalar_lea.vmem [#allocation2], %s146
        %p148 = pneg %p37
        %p149 = pneg %p34
        %p150 = pneg %p58
        %p151 = pneg %p55
        %p152 = pneg %p84
        %p153 = pneg %p81
        %s154 = smul.u32 16, %s16
        %p155 = scmp.lt.s32.totalorder %s154, 31
        %s156 = scalar_select %p155, %s154, 31
        %s157 = smul.addr %s156, 8
        %s158 = scalar_lea.vmem %s2, %s157
        %s159 = smul.u32 16, %s16
        %s160 = smul.u32 16, %s16
        %p161 = scmp.lt.s32.totalorder %s160, 31
        %s162 = scalar_select %p161, %s160, 31
        %s163 = smul.addr %s162, 8
        %s164 = scalar_lea.vmem %s2, %s163
        %s165 = smul.u32 16, %s16
        %v166 = vld [vmem:[%s138] sm:$0xff]
        %v167 = vld [vmem:[%s138 + $0x8] sm:$0xff]
        %v168 = vld [vmem:[%s138 + $0x10] sm:$0xff]
        %v169 = vld [vmem:[%s138 + $0x18] sm:$0xff]
        %v170 = vld [vmem:[%s138 + $0x20] sm:$0xff]
        %v171 = vld [vmem:[%s138 + $0x28] sm:$0xff]
        %v172 = vld [vmem:[%s138 + $0x30] sm:$0xff]
        %v173 = vld [vmem:[%s138 + $0x38] sm:$0xff]
        %v174 = vld [vmem:[%s138 + $0x40] sm:$0xff]
        %v175 = vld [vmem:[%s138 + $0x48] sm:$0xff]
        %v176 = vld [vmem:[%s138 + $0x50] sm:$0xff]
        %v177 = vld [vmem:[%s138 + $0x58] sm:$0xff]
        %v178 = vld [vmem:[%s138 + $0x60] sm:$0xff]
        %v179 = vld [vmem:[%s138 + $0x68] sm:$0xff]
        %v180 = vld [vmem:[%s138 + $0x70] sm:$0xff]
        %v181 = vld [vmem:[%s138 + $0x78] sm:$0xff]
        %v182 = vld [vmem:[%s1] sm:$0xff]
        %v183 = vld [vmem:[%s1 + $0x8] sm:$0xff]
        %v184 = vld [vmem:[%s1 + $0x10] sm:$0xff]
        %v185 = vld [vmem:[%s1 + $0x18] sm:$0xff]
        %v186 = vld [vmem:[%s1 + $0x20] sm:$0xff]
        %v187 = vld [vmem:[%s1 + $0x28] sm:$0xff]
        %v188 = vld [vmem:[%s1 + $0x30] sm:$0xff]
        %v189 = vld [vmem:[%s1 + $0x38] sm:$0xff]
        %v190 = vld [vmem:[%s1 + $0x40] sm:$0xff]
        %v191 = vld [vmem:[%s1 + $0x48] sm:$0xff]
        %v192 = vld [vmem:[%s1 + $0x50] sm:$0xff]
        %v193 = vld [vmem:[%s1 + $0x58] sm:$0xff]
        %v194 = vld [vmem:[%s1 + $0x60] sm:$0xff]
        %v195 = vld [vmem:[%s1 + $0x68] sm:$0xff]
        %v196 = vld [vmem:[%s1 + $0x70] sm:$0xff]
        %v197 = vld [vmem:[%s1 + $0x78] sm:$0xff]
        %198 = vmatprep.subr.mxu0 0.0
        %199 = vmatpush1.msra.mxu0 %v182
        %200 = vmatprep.subr.mxu0 0.0
        %201 = vmatpush1.msra.mxu0 %v183
        %202 = vmatprep.subr.mxu0 0.0
        %203 = vmatpush1.msra.mxu0 %v184
        %204 = vmatprep.subr.mxu0 0.0
        %205 = vmatpush1.msra.mxu0 %v185
        %206 = vmatprep.subr.mxu0 0.0
        %207 = vmatpush1.msra.mxu0 %v186
        %208 = vmatprep.subr.mxu0 0.0
        %209 = vmatpush1.msra.mxu0 %v187
        %210 = vmatprep.subr.mxu0 0.0
        %211 = vmatpush1.msra.mxu0 %v188
        %212 = vmatprep.subr.mxu0 0.0
        %213 = vmatpush1.msra.mxu0 %v189
        %214 = vmatprep.subr.mxu0 0.0
        %215 = vmatpush1.msra.mxu0 %v190
        %216 = vmatprep.subr.mxu0 0.0
        %217 = vmatpush1.msra.mxu0 %v191
        %218 = vmatprep.subr.mxu0 0.0
        %219 = vmatpush1.msra.mxu0 %v192
        %220 = vmatprep.subr.mxu0 0.0
        %221 = vmatpush1.msra.mxu0 %v193
        %222 = vmatprep.subr.mxu0 0.0
        %223 = vmatpush1.msra.mxu0 %v194
        %224 = vmatprep.subr.mxu0 0.0
        %225 = vmatpush1.msra.mxu0 %v195
        %226 = vmatprep.subr.mxu0 0.0
        %227 = vmatpush1.msra.mxu0 %v196
        %228 = vmatprep.subr.mxu0 0.0
        %229 = vmatpush1.msra.mxu0 %v197
        %230 = vmatprep.subr.mxu0 0.0
        %231 = vmatpush1.msra.mxu0 0.0
        %232 = vmatprep.subr.mxu0 0.0
        %233 = vmatpush1.msra.mxu0 0.0
        %234 = vmatprep.subr.mxu0 0.0
        %235 = vmatpush1.msra.mxu0 0.0
        %236 = vmatprep.subr.mxu0 0.0
        %237 = vmatpush1.msra.mxu0 0.0
        %238 = vmatprep.subr.mxu0 0.0
        %239 = vmatpush1.msra.mxu0 0.0
        %240 = vmatprep.subr.mxu0 0.0
        %241 = vmatpush1.msra.mxu0 0.0
        %242 = vmatprep.subr.mxu0 0.0
        %243 = vmatpush1.msra.mxu0 0.0
        %244 = vmatprep.subr.mxu0 0.0
        %245 = vmatpush1.msra.mxu0 0.0
        %246 = vmatprep.subr.mxu0 0.0
        %247 = vmatpush1.msra.mxu0 0.0
        %248 = vmatprep.subr.mxu0 0.0
        %249 = vmatpush1.msra.mxu0 0.0
        %250 = vmatprep.subr.mxu0 0.0
        %251 = vmatpush1.msra.mxu0 0.0
        %252 = vmatprep.subr.mxu0 0.0
        %253 = vmatpush1.msra.mxu0 0.0
        %254 = vmatprep.subr.mxu0 0.0
        %255 = vmatpush1.msra.mxu0 0.0
        %256 = vmatprep.subr.mxu0 0.0
        %257 = vmatpush1.msra.mxu0 0.0
        %258 = vmatprep.subr.mxu0 0.0
        %259 = vmatpush1.msra.mxu0 0.0
        %260 = vmatprep.subr.mxu0 0.0
        %261 = vmatpush1.msra.mxu0 0.0
        %262 = vmatprep.mubr.f32.mxu0 0.0
        %263 = vmatmul.mubr.f32.gmra.mrb[0].mxu0 %v166
        %v264 = vpop.f32.mrb[0].mxu0
        %v265 = vadd.f32 0.0, %v264
        %v266 = vpop.f32.mrb[0].mxu0
        %267 = vmatprep.mubr.f32.mxu0 0.0
        %268 = vmatmul.mubr.f32.gmra.mrb[0].mxu0 %v167
        %v269 = vpop.f32.mrb[0].mxu0
        %v270 = vadd.f32 0.0, %v269
        %v271 = vpop.f32.mrb[0].mxu0
        %272 = vmatprep.mubr.f32.mxu0 0.0
        %273 = vmatmul.mubr.f32.gmra.mrb[0].mxu0 %v168
        %v274 = vpop.f32.mrb[0].mxu0
        %v275 = vadd.f32 0.0, %v274
        %v276 = vpop.f32.mrb[0].mxu0
        %277 = vmatprep.mubr.f32.mxu0 0.0
        %278 = vmatmul.mubr.f32.gmra.mrb[0].mxu0 %v169
        %v279 = vpop.f32.mrb[0].mxu0
        %v280 = vadd.f32 0.0, %v279
        %v281 = vpop.f32.mrb[0].mxu0
        %282 = vmatprep.mubr.f32.mxu0 0.0
        %283 = vmatmul.mubr.f32.gmra.mrb[0].mxu0 %v170
        %v284 = vpop.f32.mrb[0].mxu0
        %v285 = vadd.f32 0.0, %v284
        %v286 = vpop.f32.mrb[0].mxu0
        %287 = vmatprep.mubr.f32.mxu0 0.0
        %288 = vmatmul.mubr.f32.gmra.mrb[0].mxu0 %v171
        %v289 = vpop.f32.mrb[0].mxu0
        %v290 = vadd.f32 0.0, %v289
        %v291 = vpop.f32.mrb[0].mxu0
        %292 = vmatprep.mubr.f32.mxu0 0.0
        %293 = vmatmul.mubr.f32.gmra.mrb[0].mxu0 %v172
        %v294 = vpop.f32.mrb[0].mxu0
        %v295 = vadd.f32 0.0, %v294
        %v296 = vpop.f32.mrb[0].mxu0
        %297 = vmatprep.mubr.f32.mxu0 0.0
        %298 = vmatmul.mubr.f32.gmra.mrb[0].mxu0 %v173
        %v299 = vpop.f32.mrb[0].mxu0
        %v300 = vadd.f32 0.0, %v299
        %v301 = vpop.f32.mrb[0].mxu0
        %302 = vmatprep.mubr.f32.mxu0 0.0
        %303 = vmatmul.mubr.f32.gmra.mrb[0].mxu0 %v174
        %v304 = vpop.f32.mrb[0].mxu0
        %v305 = vadd.f32 0.0, %v304
        %v306 = vpop.f32.mrb[0].mxu0
        %307 = vmatprep.mubr.f32.mxu0 0.0
        %308 = vmatmul.mubr.f32.gmra.mrb[0].mxu0 %v175
        %v309 = vpop.f32.mrb[0].mxu0
        %v310 = vadd.f32 0.0, %v309
        %v311 = vpop.f32.mrb[0].mxu0
        %312 = vmatprep.mubr.f32.mxu0 0.0
        %313 = vmatmul.mubr.f32.gmra.mrb[0].mxu0 %v176
        %v314 = vpop.f32.mrb[0].mxu0
        %v315 = vadd.f32 0.0, %v314
        %v316 = vpop.f32.mrb[0].mxu0
        %317 = vmatprep.mubr.f32.mxu0 0.0
        %318 = vmatmul.mubr.f32.gmra.mrb[0].mxu0 %v177
        %v319 = vpop.f32.mrb[0].mxu0
        %v320 = vadd.f32 0.0, %v319
        %v321 = vpop.f32.mrb[0].mxu0
        %322 = vmatprep.mubr.f32.mxu0 0.0
        %323 = vmatmul.mubr.f32.gmra.mrb[0].mxu0 %v178
        %v324 = vpop.f32.mrb[0].mxu0
        %v325 = vadd.f32 0.0, %v324
        %v326 = vpop.f32.mrb[0].mxu0
        %327 = vmatprep.mubr.f32.mxu0 0.0
        %328 = vmatmul.mubr.f32.gmra.mrb[0].mxu0 %v179
        %v329 = vpop.f32.mrb[0].mxu0
        %v330 = vadd.f32 0.0, %v329
        %v331 = vpop.f32.mrb[0].mxu0
        %332 = vmatprep.mubr.f32.mxu0 0.0
        %333 = vmatmul.mubr.f32.gmra.mrb[0].mxu0 %v180
        %v334 = vpop.f32.mrb[0].mxu0
        %v335 = vadd.f32 0.0, %v334
        %v336 = vpop.f32.mrb[0].mxu0
        %337 = vmatprep.mubr.f32.mxu0 0.0
        %338 = vmatmul.mubr.f32.gmra.mrb[0].mxu0 %v181
        %v339 = vpop.f32.mrb[0].mxu0
        %v340 = vadd.f32 0.0, %v339
        %v341 = vpop.f32.mrb[0].mxu0
        %342 = vdwg.mxu0
        %vm343 = vcmask 154624
        %344 = vst.msk [vmem:[%s164] sm:$0xff] %vm343, %v265
        %345 = vst.msk [vmem:[%s164 + $0x8] sm:$0xff] %vm343, %v270
        %346 = vst.msk [vmem:[%s164 + $0x10] sm:$0xff] %vm343, %v275
        %347 = vst.msk [vmem:[%s164 + $0x18] sm:$0xff] %vm343, %v280
        %348 = vst.msk [vmem:[%s164 + $0x20] sm:$0xff] %vm343, %v285
        %349 = vst.msk [vmem:[%s164 + $0x28] sm:$0xff] %vm343, %v290
        %350 = vst.msk [vmem:[%s164 + $0x30] sm:$0xff] %vm343, %v295
        %351 = vst.msk [vmem:[%s164 + $0x38] sm:$0xff] %vm343, %v300
        %352 = vst.msk [vmem:[%s164 + $0x40] sm:$0xff] %vm343, %v305
        %353 = vst.msk [vmem:[%s164 + $0x48] sm:$0xff] %vm343, %v310
        %354 = vst.msk [vmem:[%s164 + $0x50] sm:$0xff] %vm343, %v315
        %355 = vst.msk [vmem:[%s164 + $0x58] sm:$0xff] %vm343, %v320
        %356 = vst.msk [vmem:[%s164 + $0x60] sm:$0xff] %vm343, %v325
        %357 = vst.msk [vmem:[%s164 + $0x68] sm:$0xff] %vm343, %v330
        %358 = vst.msk [vmem:[%s164 + $0x70] sm:$0xff] %vm343, %v335
        %359 = vst.msk [vmem:[%s164 + $0x78] sm:$0xff] %vm343, %v340
        %s360 = smul.u32 16, %s16
        %p361 = scmp.lt.s32.totalorder %s360, 31
        %s362 = scalar_select %p361, %s360, 31
        %s363 = smul.addr %s362, 8
        %s364 = scalar_lea.vmem %s2, %s363
        // Predicated region
        $region33: #{tpu_custom_call.1} parent=27 // pred_check
          %p365 = pneg %p81
        $region34: #{tpu_custom_call.1} parent=27 // pred_check_branch
          %367 = sbr.rel (%p365) target = $region36
        $region35: #{tpu_custom_call.1} parent=27 // pred_region
          %s368 = smul.u32 16, %s16
        $region36: #{tpu_custom_call.1} parent=27 // pred_fallthru
          _
      $region28: #{tpu_custom_call.1} parent=5 // pred_fallthru
        _
      %p369 = scmp.le.s32.totalorder 2, %s11
      // Predicated region
      $region37: #{tpu_custom_call.1} parent=5 // pred_check
        %p370 = pneg %p369
      $region38: #{tpu_custom_call.1} parent=5 // pred_check_branch
        %372 = sbr.rel (%p370) target = $region40
      $region39: #{tpu_custom_call.1} parent=5 // pred_region
        %s373 = ssub.s32 %s11, 2
        // Predicated region
        $region41: #{tpu_custom_call.1} parent=39 // pred_check
          %p374 = pneg %p87
        $region42: #{tpu_custom_call.1} parent=39 // pred_check_branch
          %376 = sbr.rel (%p374) target = $region44
        $region43: #{tpu_custom_call.1} parent=39 // pred_region
          %s377 = smul.u32 16, %s17
          %p378 = scmp.lt.s32.totalorder %s377, 31
          %s379 = scalar_select %p378, %s377, 31
          %s380 = smul.addr %s379, 8
          %s381 = scalar_lea.vmem %s2, %s380
        $region44: #{tpu_custom_call.1} parent=39 // pred_fallthru
          _
      $region40: #{tpu_custom_call.1} parent=5 // pred_fallthru
        _
    $region6: #{tpu_custom_call.1} parent=1 // loop_footer
      %s15 = sadd.s32 1, %s11
    $region7: #{tpu_custom_call.1} parent=1 // loop_footer_branch
      %10 = sbr.rel target = $region3
    $region8: #{tpu_custom_call.1} parent=1 // loop_exit
      _
    %382 = vsyncpa [#allocation3], 1
    %s383 = scalar_lea.sflag [#allocation3], 1
    %384 = vsyncpa %s383, 1

</llo_original>
